<compile_context>
chip_gen: v7x
topology: tpu7x:2x2x1
jax: 0.10.0
libtpu: 0.0.40
codegen_flags: <defaults>
</compile_context>

<pallas_src>
import functools

import jax
import jax.numpy as jnp
from jax import lax
from jax.experimental import pallas as pl
from jax.experimental.pallas import tpu as pltpu

_LANE = 128
_NEG_INF = -1e30  # finite "masked" score: exp() underflows to 0, no inf-inf NaN risk


def _round_up(x, m):
    return (x + m - 1) // m * m


def _sublane(itemsize):
    # sublane tile height for the second-minor dim: f32 -> 8, bf16 -> 16, int8/fp8 -> 32
    return {4: 8, 2: 16, 1: 32}.get(itemsize, 8)


def _cross_attn_kernel(x1_ref, x2_ref,
                       wq_ref, bq_ref, wk_ref, bk_ref, wv_ref, bv_ref,
                       o_ref,
                       q_sc, m_sc, l_sc, acc_sc,
                       *, scale, s2_valid, mask_s2, approx_recip):
    j = pl.program_id(1)                          # S2-tile index ("arbitrary" axis)
    BB, S1p, Dp = x1_ref.shape
    _, TS2, _ = x2_ref.shape
    in_dtype = x1_ref.dtype

    @pl.when(j == 0)
    def _():
        # Q projection once per batch block; persists in VMEM across the S2 tiles.
        x1 = x1_ref[...].reshape(BB * S1p, Dp)    # free view: S1p % sublane == 0, Dp % 128 == 0
        q = jnp.dot(x1, wq_ref[...], preferred_element_type=jnp.float32)
        q = (q + bq_ref[...].astype(jnp.float32)) * scale   # fold static softmax scale into q
        q_sc[...] = q.astype(in_dtype).reshape(BB, S1p, Dp)
        m_sc[...] = jnp.full_like(m_sc, -jnp.inf)
        l_sc[...] = jnp.zeros_like(l_sc)
        acc_sc[...] = jnp.zeros_like(acc_sc)

    # K / V projections for this S2 tile. Operands stay in the activation dtype (full-rate
    # MXU); only the accumulation and softmax math run in f32.
    x2 = x2_ref[...].reshape(BB * TS2, Dp)
    k = jnp.dot(x2, wk_ref[...], preferred_element_type=jnp.float32) + bk_ref[...].astype(jnp.float32)
    v = jnp.dot(x2, wv_ref[...], preferred_element_type=jnp.float32) + bv_ref[...].astype(jnp.float32)
    k = k.astype(in_dtype).reshape(BB, TS2, Dp)
    v = v.astype(in_dtype).reshape(BB, TS2, Dp)

    # scores = (scale*q) @ k^T for this tile, batched over BB, f32 accumulation.
    q = q_sc[...]
    s = jnp.einsum('bqd,bkd->bqk', q, k, preferred_element_type=jnp.float32)   # (BB, S1p, TS2)

    if mask_s2:  # static: only emitted when S2 was padded
        col = j * TS2 + lax.broadcasted_iota(jnp.int32, (1, 1, TS2), 2)
        s = jnp.where(col < s2_valid, s, _NEG_INF)

    # Online (flash-style) softmax update; normalization deferred to the final tile.
    m_prev = m_sc[...]
    m_new = jnp.maximum(m_prev, jnp.max(s, axis=-1, keepdims=True))
    alpha = jnp.exp(m_prev - m_new)
    p = jnp.exp(s - m_new)
    l_sc[...] = alpha * l_sc[...] + jnp.sum(p, axis=-1, keepdims=True)
    acc_sc[...] = alpha * acc_sc[...] + jnp.einsum(
        'bqk,bkd->bqd', p.astype(in_dtype), v, preferred_element_type=jnp.float32)
    m_sc[...] = m_new

    @pl.when(j == pl.num_programs(1) - 1)
    def _():
        if approx_recip:
            inv_l = pl.reciprocal(l_sc[...], approx=True)   # EUP slot — essentially free
        else:
            inv_l = 1.0 / l_sc[...]
        o_ref[...] = (acc_sc[...] * inv_l).astype(o_ref.dtype)


def _block_footprint(bb, S1p, TS2, Dp, itemsize):
    """Rough per-grid-step VMEM bytes (pipeline buffers + scratch + f32 temporaries)."""
    return (
        2 * bb * S1p * Dp * itemsize           # x1 block (double-buffered)
        + 2 * bb * TS2 * Dp * itemsize         # x2 block (double-buffered)
        + 2 * bb * S1p * Dp * itemsize         # out block (double-buffered)
        + 2 * 3 * (Dp * Dp + Dp) * itemsize    # weights + biases (double-buffered, see TODO)
        + bb * S1p * Dp * itemsize             # q scratch
        + bb * S1p * Dp * 4                    # acc scratch (f32)
        + 2 * bb * S1p * 4                     # m / l scratch (f32)
        + 2 * bb * TS2 * Dp * 4                # k / v f32 intermediates
        + 2 * bb * S1p * TS2 * 4               # scores + probs for one tile (f32)
    )


def _pick_batch_block(B, S1p, TS2, Dp, itemsize, cap_bytes, m_target):
    """Pack batch elements per grid step until the projection M-dim hits m_target or the
    per-step VMEM footprint exceeds cap_bytes; always keep >= 2 steps on the parallel axis
    (megacore sharding on v7x + DMA/compute overlap on all generations)."""
    best = 1
    for bb in range(1, B + 1):
        if B % bb:
            continue
        if B >= 2 and B // bb < 2:
            continue
        if _block_footprint(bb, S1p, TS2, Dp, itemsize) > cap_bytes:
            break
        best = bb
        if bb * S1p >= m_target:
            break
    return best


def _vmem_capacity_bytes():
    try:
        return int(pltpu.get_tpu_info().vmem_capacity_bytes)
    except Exception:
        return 64 << 20   # conservative (v7x-sized) fallback


def cross_attention(x1, x2, params, *, approx_reciprocal=True):
    """x1: (B, S1, D), x2: (B, S2, D). params: torch nn.Linear layout wq/bq/wk/bk/wv/bv.

    Set approx_reciprocal=False for bit-strict softmax normalization (EUP approx adds ~1e-3
    relative error to the denominator)."""
    B, S1, D = x1.shape
    B2, S2, D2 = x2.shape
    if D != D2:
        raise ValueError(f"Feature dimensions of x1 ({D}) and x2 ({D2}) must match")
    assert B == B2, "batch dims must match"

    dtype = x1.dtype
    itemsize = dtype.itemsize
    scale = float(D) ** -0.5                      # static — baked into the kernel
    Dp = _round_up(D, _LANE)                      # lane-dense feature dim
    sub = _sublane(itemsize)
    S1p = _round_up(S1, sub)                      # sublane-aligned -> free in-kernel reshapes

    # S2 tiling: one tile if it's small, otherwise 512-wide tiles over an "arbitrary" axis.
    ts2_target = 512
    s2_sub = _round_up(S2, sub)
    if s2_sub <= ts2_target:
        TS2, S2p = s2_sub, s2_sub
    else:
        TS2, S2p = ts2_target, _round_up(S2, ts2_target)
    mask_s2 = (S2p != S2)

    def pad_act(a, s_to):
        _, S, Dd = a.shape
        if s_to == S and Dp == Dd:
            return a
        return jnp.pad(a, ((0, 0), (0, s_to - S), (0, Dp - Dd)))

    def prep_w(w):                                # torch (out, in) -> (in, out), cast, pad
        wt = jnp.asarray(w).T.astype(dtype)
        if Dp != D:
            wt = jnp.pad(wt, ((0, Dp - D), (0, Dp - D)))
        return wt

    def prep_b(b):
        bb = jnp.asarray(b).reshape(1, D).astype(dtype)
        if Dp != D:
            bb = jnp.pad(bb, ((0, 0), (0, Dp - D)))
        return bb

    x1p, x2p = pad_act(x1, S1p), pad_act(x2, S2p)
    wq, wk, wv = prep_w(params["wq"]), prep_w(params["wk"]), prep_w(params["wv"])
    bq, bk, bv = prep_b(params["bq"]), prep_b(params["bk"]), prep_b(params["bv"])

    # Generation-aware sizing (v5e/v6e: 128 MiB VMEM, v7x: 64 MiB).
    vmem_cap = _vmem_capacity_bytes()
    cap_bytes = vmem_cap // 4                     # ~16 MiB on v7x, ~32 MiB on v5e/v6e
    m_target = 512 if vmem_cap >= (96 << 20) else 256
    BB = _pick_batch_block(B, S1p, TS2, Dp, itemsize, cap_bytes, m_target)

    est_vmem = _block_footprint(BB, S1p, TS2, Dp, itemsize)
    vmem_limit = int(min(vmem_cap * 3 // 4, max(32 << 20, 2 * est_vmem)))

    grid = (B // BB, S2p // TS2)

    x1_spec = pl.BlockSpec((BB, S1p, Dp), lambda i, j: (i, 0, 0))
    x2_spec = pl.BlockSpec((BB, TS2, Dp), lambda i, j: (i, j, 0))
    w_spec = pl.BlockSpec((Dp, Dp), lambda i, j: (0, 0))
    b_spec = pl.BlockSpec((1, Dp), lambda i, j: (0, 0))
    out_spec = pl.BlockSpec((BB, S1p, Dp), lambda i, j: (i, 0, 0))

    flops = 2 * B * (S1 * D * D + 2 * S2 * D * D + 2 * S1 * S2 * D)
    bytes_accessed = (x1p.size * itemsize + x2p.size * itemsize
                      + 3 * (Dp * Dp + Dp) * itemsize
                      + B * S1p * Dp * itemsize)

    kernel = functools.partial(
        _cross_attn_kernel,
        scale=scale, s2_valid=S2, mask_s2=mask_s2, approx_recip=approx_reciprocal)

    out = pl.pallas_call(
        kernel,
        out_shape=jax.ShapeDtypeStruct((B, S1p, Dp), dtype),
        grid_spec=pltpu.PrefetchScalarGridSpec(
            num_scalar_prefetch=0,
            grid=grid,
            in_specs=[
                x1_spec, x2_spec,
                w_spec, b_spec,      # wq, bq
                w_spec, b_spec,      # wk, bk
                w_spec, b_spec,      # wv, bv
            ],
            out_specs=out_spec,
            scratch_shapes=[
                pltpu.VMEM((BB, S1p, Dp), dtype),        # q (projected once per batch block)
                pltpu.VMEM((BB, S1p, 1), jnp.float32),   # running max m
                pltpu.VMEM((BB, S1p, 1), jnp.float32),   # running denom l
                pltpu.VMEM((BB, S1p, Dp), jnp.float32),  # unnormalized output acc
            ],
        ),
        compiler_params=pltpu.CompilerParams(
            dimension_semantics=("parallel", "arbitrary"),
            vmem_limit_bytes=vmem_limit,
        ),
        cost_estimate=pl.CostEstimate(
            flops=flops,
            transcendentals=B * S1 * S2 + B * S1 * grid[1],
            bytes_accessed=bytes_accessed),
    )(x1p, x2p, wq, bq, wk, bk, wv, bv)

    if S1p != S1 or Dp != D:
        out = out[:, :S1, :D]
    return out


def _reference(x1, x2, params):
    D = x1.shape[-1]
    q = x1 @ params["wq"].T + params["bq"]
    k = x2 @ params["wk"].T + params["bk"]
    v = x2 @ params["wv"].T + params["bv"]
    attn = jax.nn.softmax((q @ jnp.swapaxes(k, -2, -1)) * (D ** -0.5), axis=-1)
    return attn @ v


if __name__ == "__main__":
    B, S1, S2, D = 2, 8, 8, 32
    key = jax.random.PRNGKey(0)
    k_x1, k_x2, k_wq, k_bq, k_wk, k_bk, k_wv, k_bv = jax.random.split(key, 8)

    x1 = jax.random.normal(k_x1, (B, S1, D), dtype=jnp.float32)
    x2 = jax.random.normal(k_x2, (B, S2, D), dtype=jnp.float32)

    # Deterministic, torch-nn.Linear-shaped parameters: weight (out, in), bias (out,)
    bound = 1.0 / (D ** 0.5)
    params = {
        "wq": jax.random.uniform(k_wq, (D, D), minval=-bound, maxval=bound, dtype=jnp.float32),
        "bq": jax.random.uniform(k_bq, (D,), minval=-bound, maxval=bound, dtype=jnp.float32),
        "wk": jax.random.uniform(k_wk, (D, D), minval=-bound, maxval=bound, dtype=jnp.float32),
        "bk": jax.random.uniform(k_bk, (D,), minval=-bound, maxval=bound, dtype=jnp.float32),
        "wv": jax.random.uniform(k_wv, (D, D), minval=-bound, maxval=bound, dtype=jnp.float32),
        "bv": jax.random.uniform(k_bv, (D,), minval=-bound, maxval=bound, dtype=jnp.float32),
    }

    out = cross_attention(x1, x2, params)
    out = jax.block_until_ready(out)

    ref = _reference(x1, x2, params)
    assert out.shape == (B, S1, D)
    # Tolerance accounts for the EUP approximate reciprocal in the softmax denominator.
    assert jnp.allclose(out, ref, atol=2e-3, rtol=2e-3), "Pallas output mismatch vs reference"

    print("KERNEL_OK")
</pallas_src>

<mosaic_0001>
module attributes {stable_mosaic.version = 11 : i64} {
  func.func @_cross_attn_kernel(%arg0: i32, %arg1: i32, %arg2: memref<1x8x128xf32, #tpu.memory_space<vmem>>, %arg3: memref<1x8x128xf32, #tpu.memory_space<vmem>>, %arg4: memref<128x128xf32, #tpu.memory_space<vmem>>, %arg5: memref<1x128xf32, #tpu.memory_space<vmem>>, %arg6: memref<128x128xf32, #tpu.memory_space<vmem>>, %arg7: memref<1x128xf32, #tpu.memory_space<vmem>>, %arg8: memref<128x128xf32, #tpu.memory_space<vmem>>, %arg9: memref<1x128xf32, #tpu.memory_space<vmem>>, %arg10: memref<1x8x128xf32, #tpu.memory_space<vmem>>, %arg11: memref<1x8x128xf32, #tpu.memory_space<vmem>>, %arg12: memref<1x8x1xf32, #tpu.memory_space<vmem>>, %arg13: memref<1x8x1xf32, #tpu.memory_space<vmem>>, %arg14: memref<1x8x128xf32, #tpu.memory_space<vmem>>) attributes {dimension_semantics = [#tpu.dimension_semantics<parallel>, #tpu.dimension_semantics<arbitrary>], iteration_bounds = array<i64: 2, 1>, scalar_prefetch = 0 : i64, scratch_operands = 4 : i64, tpu.core_type = #tpu.core_type<tc>, window_params = [{transform_indices = @transform_0, window_bounds = array<i64: 1, 8, 128>}, {transform_indices = @transform_1, window_bounds = array<i64: 1, 8, 128>}, {pipeline_mode = #tpu.pipeline_mode<synchronous>, transform_indices = @transform_2, window_bounds = array<i64: 128, 128>}, {pipeline_mode = #tpu.pipeline_mode<synchronous>, transform_indices = @transform_3, window_bounds = array<i64: 1, 128>}, {pipeline_mode = #tpu.pipeline_mode<synchronous>, transform_indices = @transform_4, window_bounds = array<i64: 128, 128>}, {pipeline_mode = #tpu.pipeline_mode<synchronous>, transform_indices = @transform_5, window_bounds = array<i64: 1, 128>}, {pipeline_mode = #tpu.pipeline_mode<synchronous>, transform_indices = @transform_6, window_bounds = array<i64: 128, 128>}, {pipeline_mode = #tpu.pipeline_mode<synchronous>, transform_indices = @transform_7, window_bounds = array<i64: 1, 128>}, {transform_indices = @transform_8, window_bounds = array<i64: 1, 8, 128>}]} {
    %c0_i32 = arith.constant 0 : i32
    %0 = arith.cmpi eq, %arg1, %c0_i32 : i32
    %1 = arith.extui %0 : i1 to i32
    %c0_i32_0 = arith.constant 0 : i32
    %2 = arith.cmpi ne, %1, %c0_i32_0 : i32
    scf.if %2 {
      %c0_39 = arith.constant 0 : index
      %c0_40 = arith.constant 0 : index
      %c0_41 = arith.constant 0 : index
      %44 = vector.load %arg2[%c0_39, %c0_40, %c0_41] : memref<1x8x128xf32, #tpu.memory_space<vmem>>, vector<1x8x128xf32>
      %45 = vector.shape_cast %44 : vector<1x8x128xf32> to vector<8x128xf32>
      %c0_42 = arith.constant 0 : index
      %c0_43 = arith.constant 0 : index
      %46 = vector.load %arg4[%c0_42, %c0_43] : memref<128x128xf32, #tpu.memory_space<vmem>>, vector<128x128xf32>
      %cst_44 = arith.constant dense<0.000000e+00> : vector<8x128xf32>
      %47 = tpu.matmul %45, %46, %cst_44 {dimension_numbers = #tpu.dot_dimension_numbers<[1], [0], [0], [1], [0, 0, 1, 1], [], []>} : vector<8x128xf32>, vector<128x128xf32>, vector<8x128xf32> -> vector<8x128xf32>
      %c0_45 = arith.constant 0 : index
      %c0_46 = arith.constant 0 : index
      %48 = vector.load %arg5[%c0_45, %c0_46] : memref<1x128xf32, #tpu.memory_space<vmem>>, vector<1x128xf32>
      %49 = vector.broadcast %48 : vector<1x128xf32> to vector<8x128xf32>
      %50 = arith.addf %47, %49 : vector<8x128xf32>
      %cst_47 = arith.constant 0.176776692 : f32
      %51 = vector.broadcast %cst_47 : f32 to vector<8x128xf32>
      %52 = arith.mulf %50, %51 : vector<8x128xf32>
      %53 = vector.shape_cast %52 : vector<8x128xf32> to vector<1x8x128xf32>
      %c0_48 = arith.constant 0 : index
      %c0_49 = arith.constant 0 : index
      %c0_50 = arith.constant 0 : index
      %54 = vector.load %arg11[%c0_48, %c0_49, %c0_50] : memref<1x8x128xf32, #tpu.memory_space<vmem>>, vector<1x8x128xf32>
      tpu.vector_store %arg11[%c0_48, %c0_49, %c0_50], %53 {strides = array<i32>} : memref<1x8x128xf32, #tpu.memory_space<vmem>>, vector<1x8x128xf32>,
      %cst_51 = arith.constant 0xFF800000 : f32
      %55 = vector.broadcast %cst_51 : f32 to vector<1x8x1xf32>
      %c0_52 = arith.constant 0 : index
      %c0_53 = arith.constant 0 : index
      %c0_54 = arith.constant 0 : index
      %56 = vector.load %arg12[%c0_52, %c0_53, %c0_54] : memref<1x8x1xf32, #tpu.memory_space<vmem>>, vector<1x8x1xf32>
      tpu.vector_store %arg12[%c0_52, %c0_53, %c0_54], %55 {strides = array<i32>} : memref<1x8x1xf32, #tpu.memory_space<vmem>>, vector<1x8x1xf32>,
      %cst_55 = arith.constant 0.000000e+00 : f32
      %57 = vector.broadcast %cst_55 : f32 to vector<1x8x1xf32>
      %c0_56 = arith.constant 0 : index
      %c0_57 = arith.constant 0 : index
      %c0_58 = arith.constant 0 : index
      %58 = vector.load %arg13[%c0_56, %c0_57, %c0_58] : memref<1x8x1xf32, #tpu.memory_space<vmem>>, vector<1x8x1xf32>
      tpu.vector_store %arg13[%c0_56, %c0_57, %c0_58], %57 {strides = array<i32>} : memref<1x8x1xf32, #tpu.memory_space<vmem>>, vector<1x8x1xf32>,
      %cst_59 = arith.constant 0.000000e+00 : f32
      %59 = vector.broadcast %cst_59 : f32 to vector<1x8x128xf32>
      %c0_60 = arith.constant 0 : index
      %c0_61 = arith.constant 0 : index
      %c0_62 = arith.constant 0 : index
      %60 = vector.load %arg14[%c0_60, %c0_61, %c0_62] : memref<1x8x128xf32, #tpu.memory_space<vmem>>, vector<1x8x128xf32>
      tpu.vector_store %arg14[%c0_60, %c0_61, %c0_62], %59 {strides = array<i32>} : memref<1x8x128xf32, #tpu.memory_space<vmem>>, vector<1x8x128xf32>,
    } else {
    }
    %c0 = arith.constant 0 : index
    %c0_1 = arith.constant 0 : index
    %c0_2 = arith.constant 0 : index
    %3 = vector.load %arg3[%c0, %c0_1, %c0_2] : memref<1x8x128xf32, #tpu.memory_space<vmem>>, vector<1x8x128xf32>
    %4 = vector.shape_cast %3 : vector<1x8x128xf32> to vector<8x128xf32>
    %c0_3 = arith.constant 0 : index
    %c0_4 = arith.constant 0 : index
    %5 = vector.load %arg6[%c0_3, %c0_4] : memref<128x128xf32, #tpu.memory_space<vmem>>, vector<128x128xf32>
    %cst = arith.constant dense<0.000000e+00> : vector<8x128xf32>
    %6 = tpu.matmul %4, %5, %cst {dimension_numbers = #tpu.dot_dimension_numbers<[1], [0], [0], [1], [0, 0, 1, 1], [], []>} : vector<8x128xf32>, vector<128x128xf32>, vector<8x128xf32> -> vector<8x128xf32>
    %c0_5 = arith.constant 0 : index
    %c0_6 = arith.constant 0 : index
    %7 = vector.load %arg7[%c0_5, %c0_6] : memref<1x128xf32, #tpu.memory_space<vmem>>, vector<1x128xf32>
    %8 = vector.broadcast %7 : vector<1x128xf32> to vector<8x128xf32>
    %9 = arith.addf %6, %8 : vector<8x128xf32>
    %c0_7 = arith.constant 0 : index
    %c0_8 = arith.constant 0 : index
    %10 = vector.load %arg8[%c0_7, %c0_8] : memref<128x128xf32, #tpu.memory_space<vmem>>, vector<128x128xf32>
    %cst_9 = arith.constant dense<0.000000e+00> : vector<8x128xf32>
    %11 = tpu.matmul %4, %10, %cst_9 {dimension_numbers = #tpu.dot_dimension_numbers<[1], [0], [0], [1], [0, 0, 1, 1], [], []>} : vector<8x128xf32>, vector<128x128xf32>, vector<8x128xf32> -> vector<8x128xf32>
    %c0_10 = arith.constant 0 : index
    %c0_11 = arith.constant 0 : index
    %12 = vector.load %arg9[%c0_10, %c0_11] : memref<1x128xf32, #tpu.memory_space<vmem>>, vector<1x128xf32>
    %13 = vector.broadcast %12 : vector<1x128xf32> to vector<8x128xf32>
    %14 = arith.addf %11, %13 : vector<8x128xf32>
    %15 = vector.shape_cast %9 : vector<8x128xf32> to vector<1x8x128xf32>
    %16 = vector.shape_cast %14 : vector<8x128xf32> to vector<1x8x128xf32>
    %c0_12 = arith.constant 0 : index
    %c0_13 = arith.constant 0 : index
    %c0_14 = arith.constant 0 : index
    %17 = vector.load %arg11[%c0_12, %c0_13, %c0_14] : memref<1x8x128xf32, #tpu.memory_space<vmem>>, vector<1x8x128xf32>
    "tpu.trace_start"() <{level = 10 : i32, message = "bqd,bkd->bqk"}> : () -> ()
    %cst_15 = arith.constant dense<0.000000e+00> : vector<1x8x8xf32>
    %18 = tpu.matmul %17, %15, %cst_15 {dimension_numbers = #tpu.dot_dimension_numbers<[2], [2], [1], [1], [0, 0, 0, 1, 1, 1], [0], [0]>} : vector<1x8x128xf32>, vector<1x8x128xf32>, vector<1x8x8xf32> -> vector<1x8x8xf32>
    "tpu.trace_stop"() : () -> ()
    %c0_16 = arith.constant 0 : index
    %c0_17 = arith.constant 0 : index
    %c0_18 = arith.constant 0 : index
    %19 = vector.load %arg12[%c0_16, %c0_17, %c0_18] : memref<1x8x1xf32, #tpu.memory_space<vmem>>, vector<1x8x1xf32>
    %cst_19 = arith.constant dense<0xFF800000> : vector<1x8xf32>
    %20 = vector.multi_reduction <maximumf>, %18, %cst_19 [2] : vector<1x8x8xf32> to vector<1x8xf32>
    %21 = vector.shape_cast %20 : vector<1x8xf32> to vector<1x8x1xf32>
    %22 = arith.maximumf %19, %21 : vector<1x8x1xf32>
    %23 = arith.subf %19, %22 : vector<1x8x1xf32>
    %24 = math.exp %23 : vector<1x8x1xf32>
    %25 = vector.broadcast %22 : vector<1x8x1xf32> to vector<1x8x8xf32>
    %26 = arith.subf %18, %25 : vector<1x8x8xf32>
    %27 = math.exp %26 : vector<1x8x8xf32>
    %c0_20 = arith.constant 0 : index
    %c0_21 = arith.constant 0 : index
    %c0_22 = arith.constant 0 : index
    %28 = vector.load %arg13[%c0_20, %c0_21, %c0_22] : memref<1x8x1xf32, #tpu.memory_space<vmem>>, vector<1x8x1xf32>
    %29 = arith.mulf %24, %28 : vector<1x8x1xf32>
    %cst_23 = arith.constant dense<0.000000e+00> : vector<1x8xf32>
    %30 = vector.multi_reduction <add>, %27, %cst_23 [2] : vector<1x8x8xf32> to vector<1x8xf32>
    %31 = vector.shape_cast %30 : vector<1x8xf32> to vector<1x8x1xf32>
    %32 = arith.addf %29, %31 : vector<1x8x1xf32>
    %c0_24 = arith.constant 0 : index
    %c0_25 = arith.constant 0 : index
    %c0_26 = arith.constant 0 : index
    %33 = vector.load %arg13[%c0_24, %c0_25, %c0_26] : memref<1x8x1xf32, #tpu.memory_space<vmem>>, vector<1x8x1xf32>
    tpu.vector_store %arg13[%c0_24, %c0_25, %c0_26], %32 {strides = array<i32>} : memref<1x8x1xf32, #tpu.memory_space<vmem>>, vector<1x8x1xf32>,
    %c0_27 = arith.constant 0 : index
    %c0_28 = arith.constant 0 : index
    %c0_29 = arith.constant 0 : index
    %34 = vector.load %arg14[%c0_27, %c0_28, %c0_29] : memref<1x8x128xf32, #tpu.memory_space<vmem>>, vector<1x8x128xf32>
    %35 = vector.broadcast %24 : vector<1x8x1xf32> to vector<1x8x128xf32>
    %36 = arith.mulf %35, %34 : vector<1x8x128xf32>
    "tpu.trace_start"() <{level = 10 : i32, message = "bqk,bkd->bqd"}> : () -> ()
    %cst_30 = arith.constant dense<0.000000e+00> : vector<1x8x128xf32>
    %37 = tpu.matmul %27, %16, %cst_30 {dimension_numbers = #tpu.dot_dimension_numbers<[2], [1], [1], [2], [0, 0, 0, 1, 1, 2], [0], [0]>} : vector<1x8x8xf32>, vector<1x8x128xf32>, vector<1x8x128xf32> -> vector<1x8x128xf32>
    "tpu.trace_stop"() : () -> ()
    %38 = arith.addf %36, %37 : vector<1x8x128xf32>
    %c0_31 = arith.constant 0 : index
    %c0_32 = arith.constant 0 : index
    %c0_33 = arith.constant 0 : index
    %39 = vector.load %arg14[%c0_31, %c0_32, %c0_33] : memref<1x8x128xf32, #tpu.memory_space<vmem>>, vector<1x8x128xf32>
    tpu.vector_store %arg14[%c0_31, %c0_32, %c0_33], %38 {strides = array<i32>} : memref<1x8x128xf32, #tpu.memory_space<vmem>>, vector<1x8x128xf32>,
    %c0_34 = arith.constant 0 : index
    %c0_35 = arith.constant 0 : index
    %c0_36 = arith.constant 0 : index
    %40 = vector.load %arg12[%c0_34, %c0_35, %c0_36] : memref<1x8x1xf32, #tpu.memory_space<vmem>>, vector<1x8x1xf32>
    tpu.vector_store %arg12[%c0_34, %c0_35, %c0_36], %22 {strides = array<i32>} : memref<1x8x1xf32, #tpu.memory_space<vmem>>, vector<1x8x1xf32>,
    %c0_i32_37 = arith.constant 0 : i32
    %41 = arith.cmpi eq, %arg1, %c0_i32_37 : i32
    %42 = arith.extui %41 : i1 to i32
    %c0_i32_38 = arith.constant 0 : i32
    %43 = arith.cmpi ne, %42, %c0_i32_38 : i32
    scf.if %43 {
      %c0_39 = arith.constant 0 : index
      %c0_40 = arith.constant 0 : index
      %c0_41 = arith.constant 0 : index
      %44 = vector.load %arg13[%c0_39, %c0_40, %c0_41] : memref<1x8x1xf32, #tpu.memory_space<vmem>>, vector<1x8x1xf32>
      %45 = tpu.reciprocal %44 {approx = true} : vector<1x8x1xf32> -> vector<1x8x1xf32>
      %c0_42 = arith.constant 0 : index
      %c0_43 = arith.constant 0 : index
      %c0_44 = arith.constant 0 : index
      %46 = vector.load %arg14[%c0_42, %c0_43, %c0_44] : memref<1x8x128xf32, #tpu.memory_space<vmem>>, vector<1x8x128xf32>
      %47 = vector.broadcast %45 : vector<1x8x1xf32> to vector<1x8x128xf32>
      %48 = arith.mulf %46, %47 : vector<1x8x128xf32>
      %c0_45 = arith.constant 0 : index
      %c0_46 = arith.constant 0 : index
      %c0_47 = arith.constant 0 : index
      %49 = vector.load %arg10[%c0_45, %c0_46, %c0_47] : memref<1x8x128xf32, #tpu.memory_space<vmem>>, vector<1x8x128xf32>
      tpu.vector_store %arg10[%c0_45, %c0_46, %c0_47], %48 {strides = array<i32>} : memref<1x8x128xf32, #tpu.memory_space<vmem>>, vector<1x8x128xf32>,
    } else {
    }
    return
  }
  func.func @transform_0(%arg0: i32, %arg1: i32) -> (i32, i32, i32) {
    %c0_i32 = arith.constant 0 : i32
    %c0_i32_0 = arith.constant 0 : i32
    %c0_i32_1 = arith.constant 0 : i32
    return %arg0, %c0_i32, %c0_i32_0 : i32, i32, i32
  }
  func.func @transform_1(%arg0: i32, %arg1: i32) -> (i32, i32, i32) {
    %c0_i32 = arith.constant 0 : i32
    %c0_i32_0 = arith.constant 0 : i32
    return %arg0, %arg1, %c0_i32 : i32, i32, i32
  }
  func.func @transform_2(%arg0: i32, %arg1: i32) -> (i32, i32) {
    %c0_i32 = arith.constant 0 : i32
    %c0_i32_0 = arith.constant 0 : i32
    %c0_i32_1 = arith.constant 0 : i32
    return %c0_i32, %c0_i32_0 : i32, i32
  }
  func.func @transform_3(%arg0: i32, %arg1: i32) -> (i32, i32) {
    %c0_i32 = arith.constant 0 : i32
    %c0_i32_0 = arith.constant 0 : i32
    %c0_i32_1 = arith.constant 0 : i32
    return %c0_i32, %c0_i32_0 : i32, i32
  }
  func.func @transform_4(%arg0: i32, %arg1: i32) -> (i32, i32) {
    %c0_i32 = arith.constant 0 : i32
    %c0_i32_0 = arith.constant 0 : i32
    %c0_i32_1 = arith.constant 0 : i32
    return %c0_i32, %c0_i32_0 : i32, i32
  }
  func.func @transform_5(%arg0: i32, %arg1: i32) -> (i32, i32) {
    %c0_i32 = arith.constant 0 : i32
    %c0_i32_0 = arith.constant 0 : i32
    %c0_i32_1 = arith.constant 0 : i32
    return %c0_i32, %c0_i32_0 : i32, i32
  }
  func.func @transform_6(%arg0: i32, %arg1: i32) -> (i32, i32) {
    %c0_i32 = arith.constant 0 : i32
    %c0_i32_0 = arith.constant 0 : i32
    %c0_i32_1 = arith.constant 0 : i32
    return %c0_i32, %c0_i32_0 : i32, i32
  }
  func.func @transform_7(%arg0: i32, %arg1: i32) -> (i32, i32) {
    %c0_i32 = arith.constant 0 : i32
    %c0_i32_0 = arith.constant 0 : i32
    %c0_i32_1 = arith.constant 0 : i32
    return %c0_i32, %c0_i32_0 : i32, i32
  }
  func.func @transform_8(%arg0: i32, %arg1: i32) -> (i32, i32, i32) {
    %c0_i32 = arith.constant 0 : i32
    %c0_i32_0 = arith.constant 0 : i32
    %c0_i32_1 = arith.constant 0 : i32
    return %arg0, %c0_i32, %c0_i32_0 : i32, i32, i32
  }
}

</mosaic_0001>

<llo_original>
// kernel: tpu_custom_call.1
$region0: #{tpu_custom_call.1}
  #allocation0 [shape = 'u32[]', space=smem, size = 0x4, offset = 0x4, fixed_abs, tag = 'smem constant byte address 0x4 - core index']
  #allocation1 [shape = 'u32[144,128]{1,0:T(1,128)}', space=vmem, size = 0x12000, scoped, tag = 'internal scratch']
  #allocation2 [shape = 'f32[1,8,128]{2,1,0:T(8,128)}', space=vmem, size = 0x1000, scoped, tag = 'scratch operand']
  #allocation3 [shape = 'f32[1,8,1]{2,1,0:T(8,128)}', space=vmem, size = 0x1000, scoped, tag = 'scratch operand']
  #allocation4 [shape = 'f32[1,8,1]{2,1,0:T(8,128)}', space=vmem, size = 0x1000, scoped, tag = 'scratch operand']
  #allocation5 [shape = 'f32[1,8,128]{2,1,0:T(8,128)}', space=vmem, size = 0x1000, scoped, tag = 'scratch operand']
  %s0 = inlined_call_operand.hbm [shape: f32[2,8,128], index: 0, kind: input, shape index: {}]
  %s1 = inlined_call_operand.hbm [shape: f32[2,8,128], index: 1, kind: input, shape index: {}]
  %s2 = inlined_call_operand.hbm [shape: f32[128,128], index: 2, kind: input, shape index: {}]
  %s3 = inlined_call_operand.vmem [shape: f32[1,128], index: 3, kind: input, shape index: {}]
  %s4 = inlined_call_operand.hbm [shape: f32[128,128], index: 4, kind: input, shape index: {}]
  %s5 = inlined_call_operand.vmem [shape: f32[1,128], index: 5, kind: input, shape index: {}]
  %s6 = inlined_call_operand.hbm [shape: f32[128,128], index: 6, kind: input, shape index: {}]
  %s7 = inlined_call_operand.vmem [shape: f32[1,128], index: 7, kind: input, shape index: {}]
  %s8 = inlined_call_operand.hbm [shape: f32[2,8,128], index: 8, kind: output, shape index: {}]
  %s9 = sld [smem:[#allocation0]]
  $region93: #{tpu_custom_call.1} parent=0
    _
  %s11 = ssub.s32 1, %s9
  %s12 = scalar_select 0, %s11, %s9
  $region1: #{tpu_custom_call.1} parent=0
    #allocation6 [shape = 'u8[8192]{0}', space=vmem, size = 0x2000, scoped, tag = 'input window, operand 0']
    #allocation7 [shape = 's32[2]{0}', space=sflag, size = 0x8, scoped, tag = 'scoped memory for tpu_custom_call.1']
    #allocation8 [shape = 's32[2]{0}', space=sflag, size = 0x8, scoped, tag = 'scoped memory for tpu_custom_call.1']
    #allocation9 [shape = 'u8[8192]{0}', space=vmem, size = 0x2000, scoped, tag = 'input window, operand 1']
    #allocation10 [shape = 's32[2]{0}', space=sflag, size = 0x8, scoped, tag = 'scoped memory for tpu_custom_call.1']
    #allocation11 [shape = 'u8[65536]{0}', space=vmem, size = 0x10000, scoped, tag = 'input window, operand 2, single buffered']
    #allocation12 [shape = 'u8[65536]{0}', space=vmem, size = 0x10000, scoped, tag = 'input window, operand 4, single buffered']
    #allocation13 [shape = 's32[1]{0}', space=sflag, size = 0x4, scoped, tag = 'scoped memory for tpu_custom_call.1']
    #allocation14 [shape = 'u8[65536]{0}', space=vmem, size = 0x10000, scoped, tag = 'input window, operand 6, single buffered']
    #allocation15 [shape = 'u8[8192]{0}', space=vmem, size = 0x2000, scoped, tag = 'output window, operand 0']
    %13 = vsyncpa [#allocation7], 0
    %s14 = scalar_lea.sflag [#allocation7], 1
    %15 = vsyncpa %s14, 0
    %16 = vsyncpa [#allocation10], 0
    %s17 = scalar_lea.sflag [#allocation10], 1
    %18 = vsyncpa %s17, 0
    %19 = vsyncpa [#allocation13], 0
    %20 = vsyncpa [#allocation8], 0
    %s21 = scalar_lea.sflag [#allocation8], 1
    %22 = vsyncpa %s21, 0
    loop: start=0, step=1, limit=4
    $region2: #{tpu_custom_call.1} parent=1 // loop_pre_header
      _
    $region3: #{tpu_custom_call.1} parent=1 // loop_header
      %s24 = sphi 0, %s28
      %p25 = scmp.ge.s32.totalorder %s24, 4
      %s31 = sphi 0, %s43
      %s32 = sphi 0, %s39
      %s33 = sphi 0, %s31
      %s34 = sphi 0, %s32
      %s35 = sphi 0, %s33
      %s36 = sphi 0, %s34
      %s46 = sphi 0, %s48
      %s49 = sphi 0, %s46
      %s50 = sphi 0, %s49
      %s66 = sphi 0, %s50
      %s74 = sphi 0, %s76
      %s77 = sphi 0, %s74
      %s78 = sphi 0, %s77
      %s94 = sphi 0, %s78
      %s98 = sphi 0, %s98
      %s100 = sphi 0, %s98
      %s101 = sphi 0, %s100
      %s115 = sphi 0, %s101
      %s119 = sphi 0, %s119
      %s121 = sphi 0, %s119
      %s122 = sphi 0, %s121
      %s136 = sphi 0, %s122
      %s140 = sphi 0, %s140
      %s142 = sphi 0, %s140
      %s143 = sphi 0, %s142
      %s157 = sphi 0, %s143
      %s161 = sphi 0, %s161
      %s163 = sphi 0, %s161
      %s164 = sphi 0, %s163
      %s178 = sphi 0, %s164
      %s182 = sphi 0, %s182
      %s184 = sphi 0, %s182
      %s185 = sphi 0, %s184
      %s199 = sphi 0, %s185
      %s203 = sphi 0, %s203
      %s205 = sphi 0, %s203
      %s206 = sphi 0, %s205
      %s220 = sphi 0, %s206
      %s226 = sphi 0, %s228
      %s229 = sphi 0, %s226
      %s230 = sphi 0, %s229
      %s246 = sphi 0, %s230
    $region4: #{tpu_custom_call.1} parent=1 // loop_header_branch
      %27 = sbr.rel (%p25) target = $region8
    $region5: #{tpu_custom_call.1} parent=1 // loop_body
      %s29 = ssub.s32 %s24, 1
      %s30 = ssub.s32 %s24, 2
      %s37 = sadd.s32 1, %s32
      %p38 = scmp.ge.s32.totalorder %s37, 1
      %s39 = scalar_select %p38, 0, %s37
      %s40 = sadd.s32 1, %s31
      %s41 = scalar_select %p38, %s40, %s31
      %p42 = scmp.ge.s32.totalorder %s41, 2
      %s43 = scalar_select %p42, 0, %s41
      %s44 = ssub.s32 %s31, %s43
      %p45 = scmp.eq.s32.totalorder %s44, 0
      %s47 = sadd.s32 %s46, 1
      %s48 = scalar_select %p45, %s46, %s47
      %p51 = pneg %p45
      %p52 = scmp.eq.s32.totalorder %s24, 1
      %p53 = por %p51, %p52
      %p54 = scmp.ne.s32.totalorder %s46, %s49
      %p55 = scmp.eq.s32.totalorder %s24, 0
      %p56 = por %p54, %p55
      %p57 = scmp.ne.s32.totalorder %s46, %s49
      %p58 = scmp.eq.s32.totalorder %s29, 1
      %p59 = por %p57, %p58
      %p60 = scmp.ne.s32.totalorder %s49, %s50
      %p61 = scmp.eq.s32.totalorder %s29, 0
      %p62 = por %p60, %p61
      %p63 = scmp.ne.s32.totalorder %s49, %s50
      %p64 = scmp.eq.s32.totalorder %s30, 1
      %p65 = por %p63, %p64
      %p67 = scmp.ne.s32.totalorder %s50, %s66
      %p68 = scmp.eq.s32.totalorder %s30, 0
      %p69 = por %p67, %p68
      %s70 = ssub.s32 %s31, %s43
      %s71 = ssub.s32 %s32, %s39
      %s72 = sor.u32 %s70, %s71
      %p73 = scmp.eq.s32.totalorder %s72, 0
      %s75 = sadd.s32 %s74, 1
      %s76 = scalar_select %p73, %s74, %s75
      %p79 = pneg %p73
      %p80 = scmp.eq.s32.totalorder %s24, 1
      %p81 = por %p79, %p80
      %p82 = scmp.ne.s32.totalorder %s74, %s77
      %p83 = scmp.eq.s32.totalorder %s24, 0
      %p84 = por %p82, %p83
      %p85 = scmp.ne.s32.totalorder %s74, %s77
      %p86 = scmp.eq.s32.totalorder %s29, 1
      %p87 = por %p85, %p86
      %p88 = scmp.ne.s32.totalorder %s77, %s78
      %p89 = scmp.eq.s32.totalorder %s29, 0
      %p90 = por %p88, %p89
      %p91 = scmp.ne.s32.totalorder %s77, %s78
      %p92 = scmp.eq.s32.totalorder %s30, 1
      %p93 = por %p91, %p92
      %p95 = scmp.ne.s32.totalorder %s78, %s94
      %p96 = scmp.eq.s32.totalorder %s30, 0
      %p97 = por %p95, %p96
      %s99 = sadd.s32 %s98, 1
      %p102 = scmp.eq.s32.totalorder %s24, 1
      %p103 = scmp.ne.s32.totalorder %s98, %s100
      %p104 = scmp.eq.s32.totalorder %s24, 0
      %p105 = por %p103, %p104
      %p106 = scmp.ne.s32.totalorder %s98, %s100
      %p107 = scmp.eq.s32.totalorder %s29, 1
      %p108 = por %p106, %p107
      %p109 = scmp.ne.s32.totalorder %s100, %s101
      %p110 = scmp.eq.s32.totalorder %s29, 0
      %p111 = por %p109, %p110
      %p112 = scmp.ne.s32.totalorder %s100, %s101
      %p113 = scmp.eq.s32.totalorder %s30, 1
      %p114 = por %p112, %p113
      %p116 = scmp.ne.s32.totalorder %s101, %s115
      %p117 = scmp.eq.s32.totalorder %s30, 0
      %p118 = por %p116, %p117
      %s120 = sadd.s32 %s119, 1
      %p123 = scmp.eq.s32.totalorder %s24, 1
      %p124 = scmp.ne.s32.totalorder %s119, %s121
      %p125 = scmp.eq.s32.totalorder %s24, 0
      %p126 = por %p124, %p125
      %p127 = scmp.ne.s32.totalorder %s119, %s121
      %p128 = scmp.eq.s32.totalorder %s29, 1
      %p129 = por %p127, %p128
      %p130 = scmp.ne.s32.totalorder %s121, %s122
      %p131 = scmp.eq.s32.totalorder %s29, 0
      %p132 = por %p130, %p131
      %p133 = scmp.ne.s32.totalorder %s121, %s122
      %p134 = scmp.eq.s32.totalorder %s30, 1
      %p135 = por %p133, %p134
      %p137 = scmp.ne.s32.totalorder %s122, %s136
      %p138 = scmp.eq.s32.totalorder %s30, 0
      %p139 = por %p137, %p138
      %s141 = sadd.s32 %s140, 1
      %p144 = scmp.eq.s32.totalorder %s24, 1
      %p145 = scmp.ne.s32.totalorder %s140, %s142
      %p146 = scmp.eq.s32.totalorder %s24, 0
      %p147 = por %p145, %p146
      %p148 = scmp.ne.s32.totalorder %s140, %s142
      %p149 = scmp.eq.s32.totalorder %s29, 1
      %p150 = por %p148, %p149
      %p151 = scmp.ne.s32.totalorder %s142, %s143
      %p152 = scmp.eq.s32.totalorder %s29, 0
      %p153 = por %p151, %p152
      %p154 = scmp.ne.s32.totalorder %s142, %s143
      %p155 = scmp.eq.s32.totalorder %s30, 1
      %p156 = por %p154, %p155
      %p158 = scmp.ne.s32.totalorder %s143, %s157
      %p159 = scmp.eq.s32.totalorder %s30, 0
      %p160 = por %p158, %p159
      %s162 = sadd.s32 %s161, 1
      %p165 = scmp.eq.s32.totalorder %s24, 1
      %p166 = scmp.ne.s32.totalorder %s161, %s163
      %p167 = scmp.eq.s32.totalorder %s24, 0
      %p168 = por %p166, %p167
      %p169 = scmp.ne.s32.totalorder %s161, %s163
      %p170 = scmp.eq.s32.totalorder %s29, 1
      %p171 = por %p169, %p170
      %p172 = scmp.ne.s32.totalorder %s163, %s164
      %p173 = scmp.eq.s32.totalorder %s29, 0
      %p174 = por %p172, %p173
      %p175 = scmp.ne.s32.totalorder %s163, %s164
      %p176 = scmp.eq.s32.totalorder %s30, 1
      %p177 = por %p175, %p176
      %p179 = scmp.ne.s32.totalorder %s164, %s178
      %p180 = scmp.eq.s32.totalorder %s30, 0
      %p181 = por %p179, %p180
      %s183 = sadd.s32 %s182, 1
      %p186 = scmp.eq.s32.totalorder %s24, 1
      %p187 = scmp.ne.s32.totalorder %s182, %s184
      %p188 = scmp.eq.s32.totalorder %s24, 0
      %p189 = por %p187, %p188
      %p190 = scmp.ne.s32.totalorder %s182, %s184
      %p191 = scmp.eq.s32.totalorder %s29, 1
      %p192 = por %p190, %p191
      %p193 = scmp.ne.s32.totalorder %s184, %s185
      %p194 = scmp.eq.s32.totalorder %s29, 0
      %p195 = por %p193, %p194
      %p196 = scmp.ne.s32.totalorder %s184, %s185
      %p197 = scmp.eq.s32.totalorder %s30, 1
      %p198 = por %p196, %p197
      %p200 = scmp.ne.s32.totalorder %s185, %s199
      %p201 = scmp.eq.s32.totalorder %s30, 0
      %p202 = por %p200, %p201
      %s204 = sadd.s32 %s203, 1
      %p207 = scmp.eq.s32.totalorder %s24, 1
      %p208 = scmp.ne.s32.totalorder %s203, %s205
      %p209 = scmp.eq.s32.totalorder %s24, 0
      %p210 = por %p208, %p209
      %p211 = scmp.ne.s32.totalorder %s203, %s205
      %p212 = scmp.eq.s32.totalorder %s29, 1
      %p213 = por %p211, %p212
      %p214 = scmp.ne.s32.totalorder %s205, %s206
      %p215 = scmp.eq.s32.totalorder %s29, 0
      %p216 = por %p214, %p215
      %p217 = scmp.ne.s32.totalorder %s205, %s206
      %p218 = scmp.eq.s32.totalorder %s30, 1
      %p219 = por %p217, %p218
      %p221 = scmp.ne.s32.totalorder %s206, %s220
      %p222 = scmp.eq.s32.totalorder %s30, 0
      %p223 = por %p221, %p222
      %s224 = ssub.s32 %s31, %s43
      %p225 = scmp.eq.s32.totalorder %s224, 0
      %s227 = sadd.s32 %s226, 1
      %s228 = scalar_select %p225, %s226, %s227
      %p231 = pneg %p225
      %p232 = scmp.eq.s32.totalorder %s24, 1
      %p233 = por %p231, %p232
      %p234 = scmp.ne.s32.totalorder %s226, %s229
      %p235 = scmp.eq.s32.totalorder %s24, 0
      %p236 = por %p234, %p235
      %p237 = scmp.ne.s32.totalorder %s226, %s229
      %p238 = scmp.eq.s32.totalorder %s29, 1
      %p239 = por %p237, %p238
      %p240 = scmp.ne.s32.totalorder %s229, %s230
      %p241 = scmp.eq.s32.totalorder %s29, 0
      %p242 = por %p240, %p241
      %p243 = scmp.ne.s32.totalorder %s229, %s230
      %p244 = scmp.eq.s32.totalorder %s30, 1
      %p245 = por %p243, %p244
      %p247 = scmp.ne.s32.totalorder %s230, %s246
      %p248 = scmp.eq.s32.totalorder %s30, 0
      %p249 = por %p247, %p248
      %p250 = scmp.le.s32.totalorder 1, %s24
      %p251 = scmp.lt.s32.totalorder %s24, 3
      %p252 = pnand %p250, %p251
      %p253 = pneg %p252
      // Predicated region
      $region9: #{tpu_custom_call.1} parent=5 // pred_check
        _
      $region10: #{tpu_custom_call.1} parent=5 // pred_check_branch
        %255 = sbr.rel (%p252) target = $region12
      $region11: #{tpu_custom_call.1} parent=5 // pred_region
        %s256 = ssub.s32 %s24, 1
        // Predicated region
        $region13: #{tpu_custom_call.1} parent=11 // pred_check
          %p257 = pneg %p111
        $region14: #{tpu_custom_call.1} parent=11 // pred_check_branch
          %259 = sbr.rel (%p257) target = $region16
        $region15: #{tpu_custom_call.1} parent=11 // pred_region
          %s261 = ssub.s32 2048, 2048
          %262 = vsyncadd [#allocation10], %s261
          %s263 = sshll.u32 [#allocation11], 4
          %s264 = int_to_ptr.vmem [resolvable:$true] %s263
          %269 = dma.hbm_to_vmem [thread:$0]  %s2, 2048, %s264, [#allocation10], 128, 128, 8
        $region16: #{tpu_custom_call.1} parent=11 // pred_fallthru
          _
        // Predicated region
        $region17: #{tpu_custom_call.1} parent=11 // pred_check
          %p270 = pneg %p132
        $region18: #{tpu_custom_call.1} parent=11 // pred_check_branch
          %272 = sbr.rel (%p270) target = $region20
        $region19: #{tpu_custom_call.1} parent=11 // pred_region
          _
        $region20: #{tpu_custom_call.1} parent=11 // pred_fallthru
          _
        // Predicated region
        $region21: #{tpu_custom_call.1} parent=11 // pred_check
          %p273 = pneg %p153
        $region22: #{tpu_custom_call.1} parent=11 // pred_check_branch
          %275 = sbr.rel (%p273) target = $region24
        $region23: #{tpu_custom_call.1} parent=11 // pred_region
          %s277 = ssub.s32 2048, 2048
          %278 = vsyncadd [#allocation13], %s277
          %s279 = sshll.u32 [#allocation12], 4
          %s280 = int_to_ptr.vmem [resolvable:$true] %s279
          %285 = dma.hbm_to_vmem [thread:$0]  %s4, 2048, %s280, [#allocation13], 128, 128, 8
        $region24: #{tpu_custom_call.1} parent=11 // pred_fallthru
          _
        // Predicated region
        $region25: #{tpu_custom_call.1} parent=11 // pred_check
          %p286 = pneg %p174
        $region26: #{tpu_custom_call.1} parent=11 // pred_check_branch
          %288 = sbr.rel (%p286) target = $region28
        $region27: #{tpu_custom_call.1} parent=11 // pred_region
          _
        $region28: #{tpu_custom_call.1} parent=11 // pred_fallthru
          _
        // Predicated region
        $region29: #{tpu_custom_call.1} parent=11 // pred_check
          %p289 = pneg %p195
        $region30: #{tpu_custom_call.1} parent=11 // pred_check_branch
          %291 = sbr.rel (%p289) target = $region32
        $region31: #{tpu_custom_call.1} parent=11 // pred_region
          %s293 = ssub.s32 2048, 2048
          %294 = vsyncadd [#allocation13], %s293
          %s295 = sshll.u32 [#allocation14], 4
          %s296 = int_to_ptr.vmem [resolvable:$true] %s295
          %301 = dma.hbm_to_vmem [thread:$0]  %s6, 2048, %s296, [#allocation13], 128, 128, 8
        $region32: #{tpu_custom_call.1} parent=11 // pred_fallthru
          _
        // Predicated region
        $region33: #{tpu_custom_call.1} parent=11 // pred_check
          %p302 = pneg %p216
        $region34: #{tpu_custom_call.1} parent=11 // pred_check_branch
          %304 = sbr.rel (%p302) target = $region36
        $region35: #{tpu_custom_call.1} parent=11 // pred_region
          _
        $region36: #{tpu_custom_call.1} parent=11 // pred_fallthru
          _
      $region12: #{tpu_custom_call.1} parent=5 // pred_fallthru
        _
      %p305 = scmp.lt.s32.totalorder %s24, 2
      // Predicated region
      $region37: #{tpu_custom_call.1} parent=5 // pred_check
        %p306 = pneg %p305
      $region38: #{tpu_custom_call.1} parent=5 // pred_check_branch
        %308 = sbr.rel (%p306) target = $region40
      $region39: #{tpu_custom_call.1} parent=5 // pred_region
        // Predicated region
        $region41: #{tpu_custom_call.1} parent=39 // pred_check
          %p309 = pneg %p56
        $region42: #{tpu_custom_call.1} parent=39 // pred_check_branch
          %311 = sbr.rel (%p309) target = $region44
        $region43: #{tpu_custom_call.1} parent=39 // pred_region
          %s312 = sand.u32 %s46, 1
          %s313 = scalar_lea.sflag [#allocation7], %s312
          %s314 = sand.u32 %s46, 1
          %s315 = smul.addr %s314, 8
          %s316 = scalar_lea.vmem [#allocation6], %s315
          %s318 = ssub.s32 128, 128
          %319 = vsyncadd %s313, %s318
          %s320 = smul.addr %s31, 128
          %s321 = scalar_lea.hbm %s0, %s320
          %s323 = sshll.u32 %s316, 4
          %s324 = int_to_ptr.vmem [resolvable:$true] %s323
          %326 = dma.hbm_to_vmem [thread:$0]  %s321, 128, %s324, %s313
        $region44: #{tpu_custom_call.1} parent=39 // pred_fallthru
          _
        // Predicated region
        $region45: #{tpu_custom_call.1} parent=39 // pred_check
          %p327 = pneg %p84
        $region46: #{tpu_custom_call.1} parent=39 // pred_check_branch
          %329 = sbr.rel (%p327) target = $region48
        $region47: #{tpu_custom_call.1} parent=39 // pred_region
          %s330 = sand.u32 %s24, 1
          %s331 = scalar_lea.sflag [#allocation10], %s330
          %s332 = sand.u32 %s74, 1
          %s333 = smul.addr %s332, 8
          %s334 = scalar_lea.vmem [#allocation9], %s333
          %s336 = ssub.s32 128, 128
          %337 = vsyncadd %s331, %s336
          %s338 = sadd.s32 %s32, %s31
          %s339 = smul.addr %s338, 128
          %s340 = scalar_lea.hbm %s1, %s339
          %s342 = sshll.u32 %s334, 4
          %s343 = int_to_ptr.vmem [resolvable:$true] %s342
          %345 = dma.hbm_to_vmem [thread:$0]  %s340, 128, %s343, %s331
        $region48: #{tpu_custom_call.1} parent=39 // pred_fallthru
          _
      $region40: #{tpu_custom_call.1} parent=5 // pred_fallthru
        _
      %p346 = scmp.le.s32.totalorder 1, %s24
      %p347 = scmp.lt.s32.totalorder %s24, 3
      %p348 = pnand %p346, %p347
      %p349 = pneg %p348
      // Predicated region
      $region49: #{tpu_custom_call.1} parent=5 // pred_check
        _
      $region50: #{tpu_custom_call.1} parent=5 // pred_check_branch
        %351 = sbr.rel (%p348) target = $region52
      $region51: #{tpu_custom_call.1} parent=5 // pred_region
        %s352 = ssub.s32 %s24, 1
        %s353 = sand.u32 %s49, 1
        %s354 = scalar_lea.sflag [#allocation7], %s353
        %s355 = sand.u32 %s49, 1
        %s356 = smul.addr %s355, 8
        %s357 = scalar_lea.vmem [#allocation6], %s356
        // Predicated region
        $region53: #{tpu_custom_call.1} parent=51 // pred_check
          %p358 = pneg %p62
        $region54: #{tpu_custom_call.1} parent=51 // pred_check_branch
          %360 = sbr.rel (%p358) target = $region56
        $region55: #{tpu_custom_call.1} parent=51 // pred_region
          %361 = dma.done %s354, 128
        $region56: #{tpu_custom_call.1} parent=51 // pred_fallthru
          _
        %s362 = sand.u32 %s29, 1
        %s363 = scalar_lea.sflag [#allocation10], %s362
        %s364 = sand.u32 %s77, 1
        %s365 = smul.addr %s364, 8
        %s366 = scalar_lea.vmem [#allocation9], %s365
        // Predicated region
        $region57: #{tpu_custom_call.1} parent=51 // pred_check
          %p367 = pneg %p90
        $region58: #{tpu_custom_call.1} parent=51 // pred_check_branch
          %369 = sbr.rel (%p367) target = $region60
        $region59: #{tpu_custom_call.1} parent=51 // pred_region
          %370 = dma.done %s363, 128
        $region60: #{tpu_custom_call.1} parent=51 // pred_fallthru
          _
        // Predicated region
        $region61: #{tpu_custom_call.1} parent=51 // pred_check
          %p371 = pneg %p111
        $region62: #{tpu_custom_call.1} parent=51 // pred_check_branch
          %373 = sbr.rel (%p371) target = $region64
        $region63: #{tpu_custom_call.1} parent=51 // pred_region
          %374 = dma.done [#allocation10], 2048
        $region64: #{tpu_custom_call.1} parent=51 // pred_fallthru
          _
        // Predicated region
        $region65: #{tpu_custom_call.1} parent=51 // pred_check
          %p375 = pneg %p153
        $region66: #{tpu_custom_call.1} parent=51 // pred_check_branch
          %377 = sbr.rel (%p375) target = $region68
        $region67: #{tpu_custom_call.1} parent=51 // pred_region
          %378 = dma.done [#allocation13], 2048
        $region68: #{tpu_custom_call.1} parent=51 // pred_fallthru
          _
        // Predicated region
        $region69: #{tpu_custom_call.1} parent=51 // pred_check
          %p379 = pneg %p195
        $region70: #{tpu_custom_call.1} parent=51 // pred_check_branch
          %381 = sbr.rel (%p379) target = $region72
        $region71: #{tpu_custom_call.1} parent=51 // pred_region
          %382 = dma.done [#allocation13], 2048
        $region72: #{tpu_custom_call.1} parent=51 // pred_fallthru
          _
        %s383 = sand.u32 %s49, 1
        %s384 = scalar_lea.sflag [#allocation7], %s383
        %s385 = sand.u32 %s49, 1
        %s386 = smul.addr %s385, 8
        %s387 = scalar_lea.vmem [#allocation6], %s386
        %p388 = pneg %p62
        %p389 = pneg %p59
        %s390 = sand.u32 %s29, 1
        %s391 = scalar_lea.sflag [#allocation10], %s390
        %s392 = sand.u32 %s77, 1
        %s393 = smul.addr %s392, 8
        %s394 = scalar_lea.vmem [#allocation9], %s393
        %p395 = pneg %p90
        %p396 = pneg %p87
        %p397 = pneg %p111
        %p398 = pneg %p108
        %p399 = pneg %p132
        %p400 = pneg %p129
        %p401 = pneg %p153
        %p402 = pneg %p150
        %p403 = pneg %p174
        %p404 = pneg %p171
        %p405 = pneg %p195
        %p406 = pneg %p192
        %p407 = pneg %p216
        %p408 = pneg %p213
        %p409 = pneg %p242
        %p410 = pneg %p239
        %s411 = sand.u32 %s229, 1
        %s412 = scalar_lea.sflag [#allocation8], %s411
        %s413 = sand.u32 %s229, 1
        %s414 = smul.addr %s413, 8
        %s415 = scalar_lea.vmem [#allocation15], %s414
        %p416 = scmp.eq.s32.totalorder %s34, 0
        // Predicated region
        $region73: #{tpu_custom_call.1} parent=51 // pred_check
          %p417 = pneg %p416
        $region74: #{tpu_custom_call.1} parent=51 // pred_check_branch
          %419 = sbr.rel (%p417) target = $region76
        $region75: #{tpu_custom_call.1} parent=51 // pred_region
          %v420 = vld [vmem:[%s357] sm:$0xff]
          %v421 = vld [vmem:[#allocation11] sm:$0xff]
          %v422 = vld [vmem:[#allocation11 + $0x8] sm:$0xff]
          %v423 = vld [vmem:[#allocation11 + $0x10] sm:$0xff]
          %v424 = vld [vmem:[#allocation11 + $0x18] sm:$0xff]
          %v425 = vld [vmem:[#allocation11 + $0x20] sm:$0xff]
          %v426 = vld [vmem:[#allocation11 + $0x28] sm:$0xff]
          %v427 = vld [vmem:[#allocation11 + $0x30] sm:$0xff]
          %v428 = vld [vmem:[#allocation11 + $0x38] sm:$0xff]
          %v429 = vld [vmem:[#allocation11 + $0x40] sm:$0xff]
          %v430 = vld [vmem:[#allocation11 + $0x48] sm:$0xff]
          %v431 = vld [vmem:[#allocation11 + $0x50] sm:$0xff]
          %v432 = vld [vmem:[#allocation11 + $0x58] sm:$0xff]
          %v433 = vld [vmem:[#allocation11 + $0x60] sm:$0xff]
          %v434 = vld [vmem:[#allocation11 + $0x68] sm:$0xff]
          %v435 = vld [vmem:[#allocation11 + $0x70] sm:$0xff]
          %v436 = vld [vmem:[#allocation11 + $0x78] sm:$0xff]
          %v437 = vld [vmem:[%s3] sm:$0x1]
          %v439 = vlaneseq
          %v440 = vshrl.u32 %v439, 7
          %v441 = vsub.s32 0, %v440
          %v442 = vrot.slane %v437, %v441
          %444 = vmatprep.subr.mxu0 0.0
          %445 = vmatpush1.msra.mxu0 %v421
          %446 = vmatprep.subr.mxu0 0.0
          %447 = vmatpush1.msra.mxu0 %v422
          %448 = vmatprep.subr.mxu0 0.0
          %449 = vmatpush1.msra.mxu0 %v423
          %450 = vmatprep.subr.mxu0 0.0
          %451 = vmatpush1.msra.mxu0 %v424
          %452 = vmatprep.subr.mxu0 0.0
          %453 = vmatpush1.msra.mxu0 %v425
          %454 = vmatprep.subr.mxu0 0.0
          %455 = vmatpush1.msra.mxu0 %v426
          %456 = vmatprep.subr.mxu0 0.0
          %457 = vmatpush1.msra.mxu0 %v427
          %458 = vmatprep.subr.mxu0 0.0
          %459 = vmatpush1.msra.mxu0 %v428
          %460 = vmatprep.subr.mxu0 0.0
          %461 = vmatpush1.msra.mxu0 %v429
          %462 = vmatprep.subr.mxu0 0.0
          %463 = vmatpush1.msra.mxu0 %v430
          %464 = vmatprep.subr.mxu0 0.0
          %465 = vmatpush1.msra.mxu0 %v431
          %466 = vmatprep.subr.mxu0 0.0
          %467 = vmatpush1.msra.mxu0 %v432
          %468 = vmatprep.subr.mxu0 0.0
          %469 = vmatpush1.msra.mxu0 %v433
          %470 = vmatprep.subr.mxu0 0.0
          %471 = vmatpush1.msra.mxu0 %v434
          %472 = vmatprep.subr.mxu0 0.0
          %473 = vmatpush1.msra.mxu0 %v435
          %474 = vmatprep.subr.mxu0 0.0
          %475 = vmatpush1.msra.mxu0 %v436
          %476 = vmatprep.subr.mxu0 0.0
          %477 = vmatpush1.msra.mxu0 0.0
          %478 = vmatprep.subr.mxu0 0.0
          %479 = vmatpush1.msra.mxu0 0.0
          %480 = vmatprep.subr.mxu0 0.0
          %481 = vmatpush1.msra.mxu0 0.0
          %482 = vmatprep.subr.mxu0 0.0
          %483 = vmatpush1.msra.mxu0 0.0
          %484 = vmatprep.subr.mxu0 0.0
          %485 = vmatpush1.msra.mxu0 0.0
          %486 = vmatprep.subr.mxu0 0.0
          %487 = vmatpush1.msra.mxu0 0.0
          %488 = vmatprep.subr.mxu0 0.0
          %489 = vmatpush1.msra.mxu0 0.0
          %490 = vmatprep.subr.mxu0 0.0
          %491 = vmatpush1.msra.mxu0 0.0
          %492 = vmatprep.subr.mxu0 0.0
          %493 = vmatpush1.msra.mxu0 0.0
          %494 = vmatprep.subr.mxu0 0.0
          %495 = vmatpush1.msra.mxu0 0.0
          %496 = vmatprep.subr.mxu0 0.0
          %497 = vmatpush1.msra.mxu0 0.0
          %498 = vmatprep.subr.mxu0 0.0
          %499 = vmatpush1.msra.mxu0 0.0
          %500 = vmatprep.subr.mxu0 0.0
          %501 = vmatpush1.msra.mxu0 0.0
          %502 = vmatprep.subr.mxu0 0.0
          %503 = vmatpush1.msra.mxu0 0.0
          %504 = vmatprep.subr.mxu0 0.0
          %505 = vmatpush1.msra.mxu0 0.0
          %506 = vmatprep.subr.mxu0 0.0
          %507 = vmatpush1.msra.mxu0 0.0
          %508 = vmatprep.mubr.f32.mxu0 0.0
          %509 = vmatmul.mubr.f32.gmra.mrb[0].mxu0 %v420
          %v510 = vpop.f32.mrb[0].mxu0
          %v511 = vadd.f32 %v442, %v510
          %v512 = vpop.f32.mrb[0].mxu0
          %513 = vdwg.mxu0
          %v514 = vmul.f32 %v511, 0.17677669
          %515 = vst [vmem:[#allocation2] sm:$0xff] %v514
          %vm516 = vcmask 7168
          %517 = vst.msk [vmem:[#allocation3] sm:$0xff] %vm516, -inf
          %518 = vst.msk [vmem:[#allocation4] sm:$0xff] %vm516, 0.0
          %519 = vst [vmem:[#allocation5] sm:$0xff] 0.0
        $region76: #{tpu_custom_call.1} parent=51 // pred_fallthru
          _
        %v520 = vld [vmem:[%s366] sm:$0xff]
        %v521 = vld [vmem:[#allocation12] sm:$0xff]
        %v522 = vld [vmem:[#allocation12 + $0x8] sm:$0xff]
        %v523 = vld [vmem:[#allocation12 + $0x10] sm:$0xff]
        %v524 = vld [vmem:[#allocation12 + $0x18] sm:$0xff]
        %v525 = vld [vmem:[#allocation12 + $0x20] sm:$0xff]
        %v526 = vld [vmem:[#allocation12 + $0x28] sm:$0xff]
        %v527 = vld [vmem:[#allocation12 + $0x30] sm:$0xff]
        %v528 = vld [vmem:[#allocation12 + $0x38] sm:$0xff]
        %v529 = vld [vmem:[#allocation12 + $0x40] sm:$0xff]
        %v530 = vld [vmem:[#allocation12 + $0x48] sm:$0xff]
        %v531 = vld [vmem:[#allocation12 + $0x50] sm:$0xff]
        %v532 = vld [vmem:[#allocation12 + $0x58] sm:$0xff]
        %v533 = vld [vmem:[#allocation12 + $0x60] sm:$0xff]
        %v534 = vld [vmem:[#allocation12 + $0x68] sm:$0xff]
        %v535 = vld [vmem:[#allocation12 + $0x70] sm:$0xff]
        %v536 = vld [vmem:[#allocation12 + $0x78] sm:$0xff]
        %v537 = vld [vmem:[%s5] sm:$0x1]
        %v539 = vlaneseq
        %v540 = vshrl.u32 %v539, 7
        %v541 = vsub.s32 0, %v540
        %v542 = vrot.slane %v537, %v541
        %544 = vmatprep.subr.mxu0 0.0
        %545 = vmatpush1.msra.mxu0 %v521
        %546 = vmatprep.subr.mxu0 0.0
        %547 = vmatpush1.msra.mxu0 %v522
        %548 = vmatprep.subr.mxu0 0.0
        %549 = vmatpush1.msra.mxu0 %v523
        %550 = vmatprep.subr.mxu0 0.0
        %551 = vmatpush1.msra.mxu0 %v524
        %552 = vmatprep.subr.mxu0 0.0
        %553 = vmatpush1.msra.mxu0 %v525
        %554 = vmatprep.subr.mxu0 0.0
        %555 = vmatpush1.msra.mxu0 %v526
        %556 = vmatprep.subr.mxu0 0.0
        %557 = vmatpush1.msra.mxu0 %v527
        %558 = vmatprep.subr.mxu0 0.0
        %559 = vmatpush1.msra.mxu0 %v528
        %560 = vmatprep.subr.mxu0 0.0
        %561 = vmatpush1.msra.mxu0 %v529
        %562 = vmatprep.subr.mxu0 0.0
        %563 = vmatpush1.msra.mxu0 %v530
        %564 = vmatprep.subr.mxu0 0.0
        %565 = vmatpush1.msra.mxu0 %v531
        %566 = vmatprep.subr.mxu0 0.0
        %567 = vmatpush1.msra.mxu0 %v532
        %568 = vmatprep.subr.mxu0 0.0
        %569 = vmatpush1.msra.mxu0 %v533
        %570 = vmatprep.subr.mxu0 0.0
        %571 = vmatpush1.msra.mxu0 %v534
        %572 = vmatprep.subr.mxu0 0.0
        %573 = vmatpush1.msra.mxu0 %v535
        %574 = vmatprep.subr.mxu0 0.0
        %575 = vmatpush1.msra.mxu0 %v536
        %576 = vmatprep.subr.mxu0 0.0
        %577 = vmatpush1.msra.mxu0 0.0
        %578 = vmatprep.subr.mxu0 0.0
        %579 = vmatpush1.msra.mxu0 0.0
        %580 = vmatprep.subr.mxu0 0.0
        %581 = vmatpush1.msra.mxu0 0.0
        %582 = vmatprep.subr.mxu0 0.0
        %583 = vmatpush1.msra.mxu0 0.0
        %584 = vmatprep.subr.mxu0 0.0
        %585 = vmatpush1.msra.mxu0 0.0
        %586 = vmatprep.subr.mxu0 0.0
        %587 = vmatpush1.msra.mxu0 0.0
        %588 = vmatprep.subr.mxu0 0.0
        %589 = vmatpush1.msra.mxu0 0.0
        %590 = vmatprep.subr.mxu0 0.0
        %591 = vmatpush1.msra.mxu0 0.0
        %592 = vmatprep.subr.mxu0 0.0
        %593 = vmatpush1.msra.mxu0 0.0
        %594 = vmatprep.subr.mxu0 0.0
        %595 = vmatpush1.msra.mxu0 0.0
        %596 = vmatprep.subr.mxu0 0.0
        %597 = vmatpush1.msra.mxu0 0.0
        %598 = vmatprep.subr.mxu0 0.0
        %599 = vmatpush1.msra.mxu0 0.0
        %600 = vmatprep.subr.mxu0 0.0
        %601 = vmatpush1.msra.mxu0 0.0
        %602 = vmatprep.subr.mxu0 0.0
        %603 = vmatpush1.msra.mxu0 0.0
        %604 = vmatprep.subr.mxu0 0.0
        %605 = vmatpush1.msra.mxu0 0.0
        %606 = vmatprep.subr.mxu0 0.0
        %607 = vmatpush1.msra.mxu0 0.0
        %608 = vmatprep.mubr.f32.mxu0 0.0
        %609 = vmatmul.mubr.f32.gmra.mrb[0].mxu0 %v520
        %v610 = vpop.f32.mrb[0].mxu0
        %v611 = vadd.f32 %v542, %v610
        %v612 = vpop.f32.mrb[0].mxu0
        %613 = vdwg.mxu0
        %v614 = vld [vmem:[#allocation14] sm:$0xff]
        %v615 = vld [vmem:[#allocation14 + $0x8] sm:$0xff]
        %v616 = vld [vmem:[#allocation14 + $0x10] sm:$0xff]
        %v617 = vld [vmem:[#allocation14 + $0x18] sm:$0xff]
        %v618 = vld [vmem:[#allocation14 + $0x20] sm:$0xff]
        %v619 = vld [vmem:[#allocation14 + $0x28] sm:$0xff]
        %v620 = vld [vmem:[#allocation14 + $0x30] sm:$0xff]
        %v621 = vld [vmem:[#allocation14 + $0x38] sm:$0xff]
        %v622 = vld [vmem:[#allocation14 + $0x40] sm:$0xff]
        %v623 = vld [vmem:[#allocation14 + $0x48] sm:$0xff]
        %v624 = vld [vmem:[#allocation14 + $0x50] sm:$0xff]
        %v625 = vld [vmem:[#allocation14 + $0x58] sm:$0xff]
        %v626 = vld [vmem:[#allocation14 + $0x60] sm:$0xff]
        %v627 = vld [vmem:[#allocation14 + $0x68] sm:$0xff]
        %v628 = vld [vmem:[#allocation14 + $0x70] sm:$0xff]
        %v629 = vld [vmem:[#allocation14 + $0x78] sm:$0xff]
        %v630 = vld [vmem:[%s7] sm:$0x1]
        %v632 = vlaneseq
        %v633 = vshrl.u32 %v632, 7
        %v634 = vsub.s32 0, %v633
        %v635 = vrot.slane %v630, %v634
        %637 = vmatprep.subr.mxu0 0.0
        %638 = vmatpush1.msra.mxu0 %v614
        %639 = vmatprep.subr.mxu0 0.0
        %640 = vmatpush1.msra.mxu0 %v615
        %641 = vmatprep.subr.mxu0 0.0
        %642 = vmatpush1.msra.mxu0 %v616
        %643 = vmatprep.subr.mxu0 0.0
        %644 = vmatpush1.msra.mxu0 %v617
        %645 = vmatprep.subr.mxu0 0.0
        %646 = vmatpush1.msra.mxu0 %v618
        %647 = vmatprep.subr.mxu0 0.0
        %648 = vmatpush1.msra.mxu0 %v619
        %649 = vmatprep.subr.mxu0 0.0
        %650 = vmatpush1.msra.mxu0 %v620
        %651 = vmatprep.subr.mxu0 0.0
        %652 = vmatpush1.msra.mxu0 %v621
        %653 = vmatprep.subr.mxu0 0.0
        %654 = vmatpush1.msra.mxu0 %v622
        %655 = vmatprep.subr.mxu0 0.0
        %656 = vmatpush1.msra.mxu0 %v623
        %657 = vmatprep.subr.mxu0 0.0
        %658 = vmatpush1.msra.mxu0 %v624
        %659 = vmatprep.subr.mxu0 0.0
        %660 = vmatpush1.msra.mxu0 %v625
        %661 = vmatprep.subr.mxu0 0.0
        %662 = vmatpush1.msra.mxu0 %v626
        %663 = vmatprep.subr.mxu0 0.0
        %664 = vmatpush1.msra.mxu0 %v627
        %665 = vmatprep.subr.mxu0 0.0
        %666 = vmatpush1.msra.mxu0 %v628
        %667 = vmatprep.subr.mxu0 0.0
        %668 = vmatpush1.msra.mxu0 %v629
        %669 = vmatprep.subr.mxu0 0.0
        %670 = vmatpush1.msra.mxu0 0.0
        %671 = vmatprep.subr.mxu0 0.0
        %672 = vmatpush1.msra.mxu0 0.0
        %673 = vmatprep.subr.mxu0 0.0
        %674 = vmatpush1.msra.mxu0 0.0
        %675 = vmatprep.subr.mxu0 0.0
        %676 = vmatpush1.msra.mxu0 0.0
        %677 = vmatprep.subr.mxu0 0.0
        %678 = vmatpush1.msra.mxu0 0.0
        %679 = vmatprep.subr.mxu0 0.0
        %680 = vmatpush1.msra.mxu0 0.0
        %681 = vmatprep.subr.mxu0 0.0
        %682 = vmatpush1.msra.mxu0 0.0
        %683 = vmatprep.subr.mxu0 0.0
        %684 = vmatpush1.msra.mxu0 0.0
        %685 = vmatprep.subr.mxu0 0.0
        %686 = vmatpush1.msra.mxu0 0.0
        %687 = vmatprep.subr.mxu0 0.0
        %688 = vmatpush1.msra.mxu0 0.0
        %689 = vmatprep.subr.mxu0 0.0
        %690 = vmatpush1.msra.mxu0 0.0
        %691 = vmatprep.subr.mxu0 0.0
        %692 = vmatpush1.msra.mxu0 0.0
        %693 = vmatprep.subr.mxu0 0.0
        %694 = vmatpush1.msra.mxu0 0.0
        %695 = vmatprep.subr.mxu0 0.0
        %696 = vmatpush1.msra.mxu0 0.0
        %697 = vmatprep.subr.mxu0 0.0
        %698 = vmatpush1.msra.mxu0 0.0
        %699 = vmatprep.subr.mxu0 0.0
        %700 = vmatpush1.msra.mxu0 0.0
        %701 = vmatprep.mubr.f32.mxu0 0.0
        %702 = vmatmul.mubr.f32.gmra.mrb[0].mxu0 %v520
        %v703 = vpop.f32.mrb[0].mxu0
        %v704 = vadd.f32 %v635, %v703
        %v705 = vpop.f32.mrb[0].mxu0
        %706 = vdwg.mxu0
        %v707 = vld [vmem:[#allocation2] sm:$0xff]
        %708 = vmatprep.subr.mxu0 0.0
        %709 = vmatpush1.xpose.msra.mxu0 %v611
        %710 = vmatprep.subr.mxu0 0.0
        %711 = vmatpush1.xpose.msra.mxu0 0.0
        %712 = vmatprep.subr.mxu0 0.0
        %713 = vmatpush1.xpose.msra.mxu0 0.0
        %714 = vmatprep.subr.mxu0 0.0
        %715 = vmatpush1.xpose.msra.mxu0 0.0
        %716 = vmatprep.subr.mxu0 0.0
        %717 = vmatpush1.xpose.msra.mxu0 0.0
        %718 = vmatprep.subr.mxu0 0.0
        %719 = vmatpush1.xpose.msra.mxu0 0.0
        %720 = vmatprep.subr.mxu0 0.0
        %721 = vmatpush1.xpose.msra.mxu0 0.0
        %722 = vmatprep.subr.mxu0 0.0
        %723 = vmatpush1.xpose.msra.mxu0 0.0
        %724 = vmatprep.subr.mxu0 0.0
        %725 = vmatpush1.xpose.msra.mxu0 0.0
        %726 = vmatprep.subr.mxu0 0.0
        %727 = vmatpush1.xpose.msra.mxu0 0.0
        %728 = vmatprep.subr.mxu0 0.0
        %729 = vmatpush1.xpose.msra.mxu0 0.0
        %730 = vmatprep.subr.mxu0 0.0
        %731 = vmatpush1.xpose.msra.mxu0 0.0
        %732 = vmatprep.subr.mxu0 0.0
        %733 = vmatpush1.xpose.msra.mxu0 0.0
        %734 = vmatprep.subr.mxu0 0.0
        %735 = vmatpush1.xpose.msra.mxu0 0.0
        %736 = vmatprep.subr.mxu0 0.0
        %737 = vmatpush1.xpose.msra.mxu0 0.0
        %738 = vmatprep.subr.mxu0 0.0
        %739 = vmatpush1.xpose.msra.mxu0 0.0
        %740 = vmatprep.subr.mxu0 0.0
        %741 = vmatpush1.xpose.msra.mxu0 0.0
        %742 = vmatprep.subr.mxu0 0.0
        %743 = vmatpush1.xpose.msra.mxu0 0.0
        %744 = vmatprep.subr.mxu0 0.0
        %745 = vmatpush1.xpose.msra.mxu0 0.0
        %746 = vmatprep.subr.mxu0 0.0
        %747 = vmatpush1.xpose.msra.mxu0 0.0
        %748 = vmatprep.subr.mxu0 0.0
        %749 = vmatpush1.xpose.msra.mxu0 0.0
        %750 = vmatprep.subr.mxu0 0.0
        %751 = vmatpush1.xpose.msra.mxu0 0.0
        %752 = vmatprep.subr.mxu0 0.0
        %753 = vmatpush1.xpose.msra.mxu0 0.0
        %754 = vmatprep.subr.mxu0 0.0
        %755 = vmatpush1.xpose.msra.mxu0 0.0
        %756 = vmatprep.subr.mxu0 0.0
        %757 = vmatpush1.xpose.msra.mxu0 0.0
        %758 = vmatprep.subr.mxu0 0.0
        %759 = vmatpush1.xpose.msra.mxu0 0.0
        %760 = vmatprep.subr.mxu0 0.0
        %761 = vmatpush1.xpose.msra.mxu0 0.0
        %762 = vmatprep.subr.mxu0 0.0
        %763 = vmatpush1.xpose.msra.mxu0 0.0
        %764 = vmatprep.subr.mxu0 0.0
        %765 = vmatpush1.xpose.msra.mxu0 0.0
        %766 = vmatprep.subr.mxu0 0.0
        %767 = vmatpush1.xpose.msra.mxu0 0.0
        %768 = vmatprep.subr.mxu0 0.0
        %769 = vmatpush1.xpose.msra.mxu0 0.0
        %770 = vmatprep.subr.mxu0 0.0
        %771 = vmatpush1.xpose.msra.mxu0 0.0
        %772 = vmatprep.mubr.f32.mxu0 0.0
        %773 = vmatmul.mubr.f32.gmra.mrb[0].mxu0 %v707
        %v774 = vpop.f32.mrb[0].mxu0
        %v775 = vadd.f32 0.0, %v774
        %v776 = vpop.f32.mrb[0].mxu0
        %777 = vdwg.mxu0
        %v778 = vld [vmem:[#allocation3] sm:$0xff]
        %vm779 = vcmask 64512
        %v780 = vsel %vm779, %v775, -inf
        %781 = vmax.xlane.f32.xlu0 %v780
        %v782 = vpop.xlane.xlu0 %781
        %v783 = vmax.f32 %v778, %v782
        %v784 = vsub.f32 %v778, %v783
        %v785 = vmul.f32 %v784, 1.442695
        %v786 = vpow.pop %v785
        %788 = vset.pattern.permute.xlu0 0
        %789 = vperm.xlu0 %788, %v783
        %v790 = vpop.permute.xlu0 %789
        %v792 = vsub.f32 %v775, %v790
        %v793 = vmul.f32 %v792, 1.442695
        %v794 = vpow.pop %v793
        %v795 = vld [vmem:[#allocation4] sm:$0xff]
        %v796 = vmul.f32 %v786, %v795
        %v797 = vsel %vm779, %v794, 0.0
        %798 = vadd.xlane.f32.xlu0 %v797
        %v799 = vpop.xlane.xlu0 %798
        %v800 = vadd.f32 %v796, %v799
        %vm801 = vcmask 7168
        %802 = vst.msk [vmem:[#allocation4] sm:$0xff] %vm801, %v800
        %v803 = vld [vmem:[#allocation5] sm:$0xff]
        %805 = vset.pattern.permute.xlu0 0
        %806 = vperm.xlu0 %805, %v786
        %v807 = vpop.permute.xlu0 %806
        %v809 = vmul.f32 %v807, %v803
        %v811 = vsel %vm779, %v794, 0
        %813 = vmatprep.subr.mxu0 0.0
        %814 = vmatpush1.msra.mxu0 %v704
        %815 = vmatprep.subr.mxu0 0.0
        %816 = vmatpush1.msra.mxu0 0.0
        %817 = vmatprep.subr.mxu0 0.0
        %818 = vmatpush1.msra.mxu0 0.0
        %819 = vmatprep.subr.mxu0 0.0
        %820 = vmatpush1.msra.mxu0 0.0
        %821 = vmatprep.subr.mxu0 0.0
        %822 = vmatpush1.msra.mxu0 0.0
        %823 = vmatprep.subr.mxu0 0.0
        %824 = vmatpush1.msra.mxu0 0.0
        %825 = vmatprep.subr.mxu0 0.0
        %826 = vmatpush1.msra.mxu0 0.0
        %827 = vmatprep.subr.mxu0 0.0
        %828 = vmatpush1.msra.mxu0 0.0
        %829 = vmatprep.subr.mxu0 0.0
        %830 = vmatpush1.msra.mxu0 0.0
        %831 = vmatprep.subr.mxu0 0.0
        %832 = vmatpush1.msra.mxu0 0.0
        %833 = vmatprep.subr.mxu0 0.0
        %834 = vmatpush1.msra.mxu0 0.0
        %835 = vmatprep.subr.mxu0 0.0
        %836 = vmatpush1.msra.mxu0 0.0
        %837 = vmatprep.subr.mxu0 0.0
        %838 = vmatpush1.msra.mxu0 0.0
        %839 = vmatprep.subr.mxu0 0.0
        %840 = vmatpush1.msra.mxu0 0.0
        %841 = vmatprep.subr.mxu0 0.0
        %842 = vmatpush1.msra.mxu0 0.0
        %843 = vmatprep.subr.mxu0 0.0
        %844 = vmatpush1.msra.mxu0 0.0
        %845 = vmatprep.subr.mxu0 0.0
        %846 = vmatpush1.msra.mxu0 0.0
        %847 = vmatprep.subr.mxu0 0.0
        %848 = vmatpush1.msra.mxu0 0.0
        %849 = vmatprep.subr.mxu0 0.0
        %850 = vmatpush1.msra.mxu0 0.0
        %851 = vmatprep.subr.mxu0 0.0
        %852 = vmatpush1.msra.mxu0 0.0
        %853 = vmatprep.subr.mxu0 0.0
        %854 = vmatpush1.msra.mxu0 0.0
        %855 = vmatprep.subr.mxu0 0.0
        %856 = vmatpush1.msra.mxu0 0.0
        %857 = vmatprep.subr.mxu0 0.0
        %858 = vmatpush1.msra.mxu0 0.0
        %859 = vmatprep.subr.mxu0 0.0
        %860 = vmatpush1.msra.mxu0 0.0
        %861 = vmatprep.subr.mxu0 0.0
        %862 = vmatpush1.msra.mxu0 0.0
        %863 = vmatprep.subr.mxu0 0.0
        %864 = vmatpush1.msra.mxu0 0.0
        %865 = vmatprep.subr.mxu0 0.0
        %866 = vmatpush1.msra.mxu0 0.0
        %867 = vmatprep.subr.mxu0 0.0
        %868 = vmatpush1.msra.mxu0 0.0
        %869 = vmatprep.subr.mxu0 0.0
        %870 = vmatpush1.msra.mxu0 0.0
        %871 = vmatprep.subr.mxu0 0.0
        %872 = vmatpush1.msra.mxu0 0.0
        %873 = vmatprep.subr.mxu0 0.0
        %874 = vmatpush1.msra.mxu0 0.0
        %875 = vmatprep.subr.mxu0 0.0
        %876 = vmatpush1.msra.mxu0 0.0
        %877 = vmatprep.mubr.f32.mxu0 0.0
        %878 = vmatmul.mubr.f32.gmra.mrb[0].mxu0 %v811
        %v879 = vpop.f32.mrb[0].mxu0
        %v880 = vadd.f32 0.0, %v879
        %v881 = vpop.f32.mrb[0].mxu0
        %882 = vdwg.mxu0
        %v883 = vadd.f32 %v809, %v880
        %884 = vst [vmem:[#allocation5] sm:$0xff] %v883
        %885 = vst.msk [vmem:[#allocation3] sm:$0xff] %vm801, %v783
        // Predicated region
        $region77: #{tpu_custom_call.1} parent=51 // pred_check
          %p886 = pneg %p416
        $region78: #{tpu_custom_call.1} parent=51 // pred_check_branch
          %888 = sbr.rel (%p886) target = $region80
        $region79: #{tpu_custom_call.1} parent=51 // pred_region
          %v889 = vld [vmem:[#allocation4] sm:$0xff]
          %v890 = vrcp.pop %v889
          %v891 = vld [vmem:[#allocation5] sm:$0xff]
          %893 = vset.pattern.permute.xlu0 0
          %894 = vperm.xlu0 %893, %v890
          %v895 = vpop.permute.xlu0 %894
          %v897 = vmul.f32 %v891, %v895
          %898 = vst [vmem:[%s415] sm:$0xff] %v897
        $region80: #{tpu_custom_call.1} parent=51 // pred_fallthru
          _
        %s899 = sand.u32 %s229, 1
        %s900 = scalar_lea.sflag [#allocation8], %s899
        %s901 = sand.u32 %s229, 1
        %s902 = smul.addr %s901, 8
        %s903 = scalar_lea.vmem [#allocation15], %s902
        // Predicated region
        $region81: #{tpu_custom_call.1} parent=51 // pred_check
          %p904 = pneg %p239
        $region82: #{tpu_custom_call.1} parent=51 // pred_check_branch
          %906 = sbr.rel (%p904) target = $region84
        $region83: #{tpu_custom_call.1} parent=51 // pred_region
          %s908 = ssub.s32 128, 128
          %909 = vsyncadd %s900, %s908
          %s910 = smul.addr %s33, 128
          %s911 = scalar_lea.hbm %s8, %s910
          %s913 = sshll.u32 %s903, 4
          %s914 = int_to_ptr.vmem [resolvable:$true] %s913
          %916 = dma.vmem_to_hbm [thread:$0]  %s914, 128, %s911, %s900
        $region84: #{tpu_custom_call.1} parent=51 // pred_fallthru
          _
      $region52: #{tpu_custom_call.1} parent=5 // pred_fallthru
        _
      %p917 = scmp.le.s32.totalorder 2, %s24
      // Predicated region
      $region85: #{tpu_custom_call.1} parent=5 // pred_check
        %p918 = pneg %p917
      $region86: #{tpu_custom_call.1} parent=5 // pred_check_branch
        %920 = sbr.rel (%p918) target = $region88
      $region87: #{tpu_custom_call.1} parent=5 // pred_region
        %s921 = ssub.s32 %s24, 2
        // Predicated region
        $region89: #{tpu_custom_call.1} parent=87 // pred_check
          %p922 = pneg %p245
        $region90: #{tpu_custom_call.1} parent=87 // pred_check_branch
          %924 = sbr.rel (%p922) target = $region92
        $region91: #{tpu_custom_call.1} parent=87 // pred_region
          %s925 = sand.u32 %s230, 1
          %s926 = scalar_lea.sflag [#allocation8], %s925
          %s927 = sand.u32 %s230, 1
          %s928 = smul.addr %s927, 8
          %s929 = scalar_lea.vmem [#allocation15], %s928
          %930 = dma.done %s926, 128
        $region92: #{tpu_custom_call.1} parent=87 // pred_fallthru
          _
      $region88: #{tpu_custom_call.1} parent=5 // pred_fallthru
        _
    $region6: #{tpu_custom_call.1} parent=1 // loop_footer
      %s28 = sadd.s32 1, %s24
    $region7: #{tpu_custom_call.1} parent=1 // loop_footer_branch
      %23 = sbr.rel target = $region3
    $region8: #{tpu_custom_call.1} parent=1 // loop_exit
      _
    %931 = vsyncpa [#allocation7], 1
    %s932 = scalar_lea.sflag [#allocation7], 1
    %933 = vsyncpa %s932, 1
    %934 = vsyncpa [#allocation10], 1
    %s935 = scalar_lea.sflag [#allocation10], 1
    %936 = vsyncpa %s935, 1
    %937 = vsyncpa [#allocation13], 1
    %938 = vsyncpa [#allocation8], 1
    %s939 = scalar_lea.sflag [#allocation8], 1
    %940 = vsyncpa %s939, 1

</llo_original>
